<compile_context>
chip_gen: v7x
topology: tpu7x:2x2x1
jax: 0.10.0
libtpu: 0.0.40
codegen_flags: <defaults>
</compile_context>

<pallas_src>
from functools import partial

import numpy as np

import jax
import jax.numpy as jnp
from jax import lax
from jax.experimental import pallas as pl
from jax.experimental.pallas import tpu as pltpu


# ---------------------------------------------------------------------------
# Fused kernel: upsample -> conv1 -> crop -> (implicit concat) -> conv2 -> ReLU
#   x_ref:      (1, Cin, Hin*Win)       flattened NCHW input
#   bridge_ref: (1, Cout, Hb*Wb)        flattened NCHW bridge
#   u_ref:      (Hin*Win, H*W)          constant bilinear-upsample operator
#   w1_ref:     (Cout, 9*Cin)           conv1 weights, K = (dy*3+dx)*Cin + ci
#   w2_ref:     (Cout, 9*2*Cout)        conv2 weights, same K ordering
#   o_ref:      (1, Cout, H*W)          flattened NCHW output (lane-dense store)
# ---------------------------------------------------------------------------
def _unet_up_block_kernel(x_ref, bridge_ref, u_ref, w1_ref, w2_ref, o_ref, *,
                          out_h, out_w, bridge_w, crop_y, crop_x):
    hw = out_h * out_w

    # lane index -> column (w) coordinate, for the row-wrap masks of the
    # width-direction conv taps.
    lane = lax.broadcasted_iota(jnp.int32, (1, hw), 1)
    wcol = lane % out_w

    def shift_lanes(v, k):
        # r[:, p] = v[:, p + k] if 0 <= p + k < hw else 0   (zero-fill lane shift)
        c = v.shape[0]
        if k == 0:
            return v
        if k > 0:
            return jnp.concatenate(
                [v[:, k:], jnp.zeros((c, k), dtype=v.dtype)], axis=1)
        return jnp.concatenate(
            [jnp.zeros((c, -k), dtype=v.dtype), v[:, :hw + k]], axis=1)

    def conv3x3(src, w_mat):
        # src: (C, H*W) flattened channel planes.  Build the (9*C, H*W) im2col
        # matrix in registers (zero padding == zero-fill shifts + wrap masks),
        # then contract with the (Cout, 9*C) weight slab in one MXU matmul.
        taps = []
        for dy in range(3):
            for dx in range(3):
                oy, ox = dy - 1, dx - 1
                t = shift_lanes(src, oy * out_w + ox)
                if ox == 1:
                    t = jnp.where(wcol < out_w - 1, t, 0.0)
                elif ox == -1:
                    t = jnp.where(wcol >= 1, t, 0.0)
                taps.append(t)
        col = jnp.concatenate(taps, axis=0)                     # (9*C, H*W)
        return jnp.dot(w_mat, col, preferred_element_type=jnp.float32)

    # --- self.up[0]: bilinear 2x upsample (align_corners=False) as one matmul ---
    x_flat = x_ref[0]                                           # (Cin, Hin*Win)
    up_in = jnp.dot(x_flat, u_ref[...],
                    preferred_element_type=jnp.float32)         # (Cin, H*W)

    # --- self.up[1]: Conv2d(Cin -> Cout, k=3, pad=1, bias=False) ----------------
    up = conv3x3(up_in, w1_ref[...])                            # (Cout, H*W)

    # --- center_crop(bridge, (H, W)), extracted in flat space -------------------
    bridge = bridge_ref[0]                                      # (Cout, Hb*Wb)
    rows = [bridge[:, (crop_y + h) * bridge_w + crop_x:
                      (crop_y + h) * bridge_w + crop_x + out_w]
            for h in range(out_h)]
    crop = jnp.concatenate(rows, axis=1)                        # (Cout, H*W)

    # --- torch.cat([up, crop], 1) folded into conv2's K dimension ---------------
    src2 = jnp.concatenate([up, crop], axis=0)                  # (2*Cout, H*W)

    # --- UNetConvBlock: Conv2d(2*Cout -> Cout, k=3, pad=1) + ReLU ---------------
    # (batch_normalization=False, dropout=0.0 for this instantiation)
    out = conv3x3(src2, w2_ref[...])                            # (Cout, H*W)
    o_ref[0] = jnp.maximum(out, 0.0).astype(o_ref.dtype)


# ---------------------------------------------------------------------------
# Constant operators / weight repacking (host-side, tiny).
# ---------------------------------------------------------------------------
def _bilinear_up_1d(n):
    """(2n, n) operator of nn.Upsample(mode='bilinear', scale=2, align_corners=False)."""
    m = np.zeros((2 * n, n), dtype=np.float32)
    for o in range(2 * n):
        src = (o + 0.5) / 2.0 - 0.5
        i0 = int(np.floor(src))
        frac = src - i0
        lo = min(max(i0, 0), n - 1)
        hi = min(max(i0 + 1, 0), n - 1)
        m[o, lo] += 1.0 - frac
        m[o, hi] += frac
    return m


def unet_up_block_forward(x_nchw, bridge_nchw, w_up, w_conv):
    """UNetUpBlock.forward.  x: (B,Cin,H,W); bridge: (B,Cout,Hb,Wb); weights OIHW."""
    B, Cin, Hi, Wi = x_nchw.shape
    Cout = w_up.shape[0]
    Ho, Wo = 2 * Hi, 2 * Wi
    _, Cb, Hb, Wb = bridge_nchw.shape
    crop_y, crop_x = (Hb - Ho) // 2, (Wb - Wo) // 2

    # Free metadata reshapes only -- no data-moving XLA glue around the kernel.
    x_flat = x_nchw.reshape(B, Cin, Hi * Wi)
    bridge_flat = bridge_nchw.reshape(B, Cb, Hb * Wb)

    # Constant flattened bilinear-upsample operator: (Hin*Win, H*W).
    u_kron = jnp.asarray(
        np.kron(_bilinear_up_1d(Hi), _bilinear_up_1d(Wi)).T, dtype=jnp.float32)

    # Conv weights as lane-dense (Cout, 9*Cin) slabs, K index = (dy*3+dx)*Cin + ci.
    w1 = jnp.transpose(w_up, (0, 2, 3, 1)).reshape(Cout, 9 * Cin)
    w2 = jnp.transpose(w_conv, (0, 2, 3, 1)).reshape(Cout, 9 * 2 * Cout)

    kernel = partial(_unet_up_block_kernel, out_h=Ho, out_w=Wo,
                     bridge_w=Wb, crop_y=crop_y, crop_x=crop_x)

    out_flat = pl.pallas_call(
        kernel,
        out_shape=jax.ShapeDtypeStruct((B, Cout, Ho * Wo), jnp.float32),
        grid=(B,),
        in_specs=[
            pl.BlockSpec((1, Cin, Hi * Wi), lambda b: (b, 0, 0)),
            pl.BlockSpec((1, Cb, Hb * Wb), lambda b: (b, 0, 0)),
            pl.BlockSpec((Hi * Wi, Ho * Wo), lambda b: (0, 0)),
            pl.BlockSpec((Cout, 9 * Cin), lambda b: (0, 0)),
            pl.BlockSpec((Cout, 9 * 2 * Cout), lambda b: (0, 0)),
        ],
        out_specs=pl.BlockSpec((1, Cout, Ho * Wo), lambda b: (b, 0, 0)),
        compiler_params=pltpu.CompilerParams(
            dimension_semantics=("parallel",)),
    )(x_flat, bridge_flat, u_kron, w1, w2)

    return out_flat.reshape(B, Cout, Ho, Wo)


# ---------------------------------------------------------------------------
# Pure-XLA reference (same math as the PyTorch module) for a correctness check.
# ---------------------------------------------------------------------------
def _reference_forward(x, bridge, w_up, w_conv):
    def up2x(a):  # NCHW bilinear x2, align_corners=False
        def up_axis(t, axis):
            n = t.shape[axis]
            prev = jnp.concatenate([lax.slice_in_dim(t, 0, 1, axis=axis),
                                    lax.slice_in_dim(t, 0, n - 1, axis=axis)], axis=axis)
            nxt = jnp.concatenate([lax.slice_in_dim(t, 1, n, axis=axis),
                                   lax.slice_in_dim(t, n - 1, n, axis=axis)], axis=axis)
            even = 0.25 * prev + 0.75 * t
            odd = 0.75 * t + 0.25 * nxt
            stacked = jnp.stack([even, odd], axis=axis + 1)
            shp = list(t.shape)
            shp[axis] = 2 * n
            return stacked.reshape(shp)
        return up_axis(up_axis(a, 2), 3)

    def conv3x3(a, w):
        return lax.conv_general_dilated(a, w, (1, 1), ((1, 1), (1, 1)),
                                        dimension_numbers=("NCHW", "OIHW", "NCHW"))

    up = conv3x3(up2x(x), w_up)
    th, tw = up.shape[2], up.shape[3]
    dy = (bridge.shape[2] - th) // 2
    dx = (bridge.shape[3] - tw) // 2
    crop = bridge[:, :, dy:dy + th, dx:dx + tw]
    return jnp.maximum(conv3x3(jnp.concatenate([up, crop], 1), w_conv), 0.0)


if __name__ == "__main__":
    key = jax.random.PRNGKey(0)
    k_x, k_b, k_w1, k_w2 = jax.random.split(key, 4)

    B, Cin, H, W = 2, 8, 8, 8
    Cout = 4

    # Inputs (NCHW, like PyTorch)
    x = jax.random.normal(k_x, (B, Cin, H, W), dtype=jnp.float32)
    bridge = jax.random.normal(k_b, (B, Cout, 20, 20), dtype=jnp.float32)  # cropped to 16x16

    # Deterministic synthetic weights (PyTorch conv weight layout: OIHW, bias=False)
    w_up = 0.1 * jax.random.normal(k_w1, (Cout, Cin, 3, 3), dtype=jnp.float32)
    w_conv = 0.1 * jax.random.normal(k_w2, (Cout, 2 * Cout, 3, 3), dtype=jnp.float32)

    out = unet_up_block_forward(x, bridge, w_up, w_conv)
    jax.block_until_ready(out)
    assert out.shape == (B, Cout, 2 * H, 2 * W), out.shape

    # Correctness check against a pure-XLA reference of the module.
    ref = _reference_forward(x, bridge, w_up, w_conv)
    err = float(jnp.max(jnp.abs(out - ref)))
    assert err < 1e-2, f"max abs error vs reference: {err}"

    print("KERNEL_OK")
</pallas_src>

<mosaic_0001>
module attributes {stable_mosaic.version = 11 : i64} {
  func.func @_unet_up_block_kernel(%arg0: i32, %arg1: memref<1x8x64xf32, #tpu.memory_space<vmem>>, %arg2: memref<1x4x400xf32, #tpu.memory_space<vmem>>, %arg3: memref<64x256xf32, #tpu.memory_space<vmem>>, %arg4: memref<4x72xf32, #tpu.memory_space<vmem>>, %arg5: memref<4x72xf32, #tpu.memory_space<vmem>>, %arg6: memref<1x4x256xf32, #tpu.memory_space<vmem>>) attributes {dimension_semantics = [#tpu.dimension_semantics<parallel>], iteration_bounds = array<i64: 2>, scalar_prefetch = 0 : i64, scratch_operands = 0 : i64, tpu.core_type = #tpu.core_type<tc>, window_params = [{transform_indices = @transform_0, window_bounds = array<i64: 1, 8, 64>}, {transform_indices = @transform_1, window_bounds = array<i64: 1, 4, 400>}, {pipeline_mode = #tpu.pipeline_mode<synchronous>, transform_indices = @transform_2, window_bounds = array<i64: 64, 256>}, {pipeline_mode = #tpu.pipeline_mode<synchronous>, transform_indices = @transform_3, window_bounds = array<i64: 4, 72>}, {pipeline_mode = #tpu.pipeline_mode<synchronous>, transform_indices = @transform_4, window_bounds = array<i64: 4, 72>}, {transform_indices = @transform_5, window_bounds = array<i64: 1, 4, 256>}]} {
    %0 = tpu.iota {dimensions = array<i32: 1>} : vector<1x256xi32>
    %c16_i32 = arith.constant 16 : i32
    %c0_i32 = arith.constant 0 : i32
    %1 = arith.cmpi eq, %c16_i32, %c0_i32 : i32
    %c1_i32 = arith.constant 1 : i32
    %2 = arith.select %1, %c1_i32, %c16_i32 : i32
    %3 = vector.broadcast %2 : i32 to vector<1x256xi32>
    %4 = arith.remsi %0, %3 : vector<1x256xi32>
    %c0_i32_0 = arith.constant 0 : i32
    %5 = vector.broadcast %c0_i32_0 : i32 to vector<1x256xi32>
    %6 = arith.cmpi ne, %4, %5 : vector<1x256xi32>
    %c0_i32_1 = arith.constant 0 : i32
    %7 = vector.broadcast %c0_i32_1 : i32 to vector<1x256xi32>
    %8 = arith.cmpi slt, %4, %7 : vector<1x256xi32>
    %c0_i32_2 = arith.constant 0 : i32
    %9 = arith.cmpi slt, %2, %c0_i32_2 : i32
    %10 = vector.broadcast %9 : i1 to vector<1x256xi1>
    %11 = vector.broadcast %10 : vector<1x256xi1> to vector<1x256xi1>
    %12 = arith.xori %8, %11 : vector<1x256xi1>
    %13 = arith.andi %12, %6 : vector<1x256xi1>
    %14 = vector.broadcast %2 : i32 to vector<1x256xi32>
    %15 = arith.addi %4, %14 : vector<1x256xi32>
    %16 = arith.select %13, %15, %4 : vector<1x256xi1>, vector<1x256xi32>
    %c0 = arith.constant 0 : index
    %c0_3 = arith.constant 0 : index
    %c0_4 = arith.constant 0 : index
    %17 = vector.load %arg1[%c0, %c0_3, %c0_4] : memref<1x8x64xf32, #tpu.memory_space<vmem>>, vector<1x8x64xf32>
    %18 = vector.shape_cast %17 : vector<1x8x64xf32> to vector<8x64xf32>
    %c0_5 = arith.constant 0 : index
    %c0_6 = arith.constant 0 : index
    %19 = vector.load %arg3[%c0_5, %c0_6] : memref<64x256xf32, #tpu.memory_space<vmem>>, vector<64x256xf32>
    %cst = arith.constant dense<0.000000e+00> : vector<8x256xf32>
    %20 = tpu.matmul %18, %19, %cst {dimension_numbers = #tpu.dot_dimension_numbers<[1], [0], [0], [1], [0, 0, 1, 1], [], []>} : vector<8x64xf32>, vector<64x256xf32>, vector<8x256xf32> -> vector<8x256xf32>
    %c0_7 = arith.constant 0 : index
    %c0_8 = arith.constant 0 : index
    %21 = vector.load %arg4[%c0_7, %c0_8] : memref<4x72xf32, #tpu.memory_space<vmem>>, vector<4x72xf32>
    %cst_9 = arith.constant 0.000000e+00 : f32
    %22 = vector.broadcast %cst_9 : f32 to vector<8x17xf32>
    %23 = vector.extract_strided_slice %20 {offsets = [0, 0], sizes = [8, 239], strides = [1, 1]} : vector<8x256xf32> to vector<8x239xf32>
    %24 = tpu.concatenate %22, %23 in 1 : vector<8x17xf32>, vector<8x239xf32> -> vector<8x256xf32>
    %c1_i32_10 = arith.constant 1 : i32
    %25 = vector.broadcast %c1_i32_10 : i32 to vector<1x256xi32>
    %26 = arith.cmpi sge, %16, %25 : vector<1x256xi32>
    %cst_11 = arith.constant 0.000000e+00 : f32
    %27 = vector.shape_cast %26 : vector<1x256xi1> to vector<1x256xi1>
    %28 = vector.broadcast %27 : vector<1x256xi1> to vector<8x256xi1>
    %29 = vector.broadcast %cst_11 : f32 to vector<8x256xf32>
    %30 = arith.select %28, %24, %29 : vector<8x256xi1>, vector<8x256xf32>
    %cst_12 = arith.constant 0.000000e+00 : f32
    %31 = vector.broadcast %cst_12 : f32 to vector<8x16xf32>
    %32 = vector.extract_strided_slice %20 {offsets = [0, 0], sizes = [8, 240], strides = [1, 1]} : vector<8x256xf32> to vector<8x240xf32>
    %33 = tpu.concatenate %31, %32 in 1 : vector<8x16xf32>, vector<8x240xf32> -> vector<8x256xf32>
    %cst_13 = arith.constant 0.000000e+00 : f32
    %34 = vector.broadcast %cst_13 : f32 to vector<8x15xf32>
    %35 = vector.extract_strided_slice %20 {offsets = [0, 0], sizes = [8, 241], strides = [1, 1]} : vector<8x256xf32> to vector<8x241xf32>
    %36 = tpu.concatenate %34, %35 in 1 : vector<8x15xf32>, vector<8x241xf32> -> vector<8x256xf32>
    %c15_i32 = arith.constant 15 : i32
    %37 = vector.broadcast %c15_i32 : i32 to vector<1x256xi32>
    %38 = arith.cmpi slt, %16, %37 : vector<1x256xi32>
    %cst_14 = arith.constant 0.000000e+00 : f32
    %39 = vector.shape_cast %38 : vector<1x256xi1> to vector<1x256xi1>
    %40 = vector.broadcast %39 : vector<1x256xi1> to vector<8x256xi1>
    %41 = vector.broadcast %cst_14 : f32 to vector<8x256xf32>
    %42 = arith.select %40, %36, %41 : vector<8x256xi1>, vector<8x256xf32>
    %cst_15 = arith.constant 0.000000e+00 : f32
    %43 = vector.broadcast %cst_15 : f32 to vector<8x1xf32>
    %44 = vector.extract_strided_slice %20 {offsets = [0, 0], sizes = [8, 255], strides = [1, 1]} : vector<8x256xf32> to vector<8x255xf32>
    %45 = tpu.concatenate %43, %44 in 1 : vector<8x1xf32>, vector<8x255xf32> -> vector<8x256xf32>
    %c1_i32_16 = arith.constant 1 : i32
    %46 = vector.broadcast %c1_i32_16 : i32 to vector<1x256xi32>
    %47 = arith.cmpi sge, %16, %46 : vector<1x256xi32>
    %cst_17 = arith.constant 0.000000e+00 : f32
    %48 = vector.shape_cast %47 : vector<1x256xi1> to vector<1x256xi1>
    %49 = vector.broadcast %48 : vector<1x256xi1> to vector<8x256xi1>
    %50 = vector.broadcast %cst_17 : f32 to vector<8x256xf32>
    %51 = arith.select %49, %45, %50 : vector<8x256xi1>, vector<8x256xf32>
    %52 = vector.extract_strided_slice %20 {offsets = [0, 1], sizes = [8, 255], strides = [1, 1]} : vector<8x256xf32> to vector<8x255xf32>
    %cst_18 = arith.constant 0.000000e+00 : f32
    %53 = vector.broadcast %cst_18 : f32 to vector<8x1xf32>
    %54 = tpu.concatenate %52, %53 in 1 : vector<8x255xf32>, vector<8x1xf32> -> vector<8x256xf32>
    %c15_i32_19 = arith.constant 15 : i32
    %55 = vector.broadcast %c15_i32_19 : i32 to vector<1x256xi32>
    %56 = arith.cmpi slt, %16, %55 : vector<1x256xi32>
    %cst_20 = arith.constant 0.000000e+00 : f32
    %57 = vector.shape_cast %56 : vector<1x256xi1> to vector<1x256xi1>
    %58 = vector.broadcast %57 : vector<1x256xi1> to vector<8x256xi1>
    %59 = vector.broadcast %cst_20 : f32 to vector<8x256xf32>
    %60 = arith.select %58, %54, %59 : vector<8x256xi1>, vector<8x256xf32>
    %61 = vector.extract_strided_slice %20 {offsets = [0, 15], sizes = [8, 241], strides = [1, 1]} : vector<8x256xf32> to vector<8x241xf32>
    %cst_21 = arith.constant 0.000000e+00 : f32
    %62 = vector.broadcast %cst_21 : f32 to vector<8x15xf32>
    %63 = tpu.concatenate %61, %62 in 1 : vector<8x241xf32>, vector<8x15xf32> -> vector<8x256xf32>
    %c1_i32_22 = arith.constant 1 : i32
    %64 = vector.broadcast %c1_i32_22 : i32 to vector<1x256xi32>
    %65 = arith.cmpi sge, %16, %64 : vector<1x256xi32>
    %cst_23 = arith.constant 0.000000e+00 : f32
    %66 = vector.shape_cast %65 : vector<1x256xi1> to vector<1x256xi1>
    %67 = vector.broadcast %66 : vector<1x256xi1> to vector<8x256xi1>
    %68 = vector.broadcast %cst_23 : f32 to vector<8x256xf32>
    %69 = arith.select %67, %63, %68 : vector<8x256xi1>, vector<8x256xf32>
    %70 = vector.extract_strided_slice %20 {offsets = [0, 16], sizes = [8, 240], strides = [1, 1]} : vector<8x256xf32> to vector<8x240xf32>
    %cst_24 = arith.constant 0.000000e+00 : f32
    %71 = vector.broadcast %cst_24 : f32 to vector<8x16xf32>
    %72 = tpu.concatenate %70, %71 in 1 : vector<8x240xf32>, vector<8x16xf32> -> vector<8x256xf32>
    %73 = vector.extract_strided_slice %20 {offsets = [0, 17], sizes = [8, 239], strides = [1, 1]} : vector<8x256xf32> to vector<8x239xf32>
    %cst_25 = arith.constant 0.000000e+00 : f32
    %74 = vector.broadcast %cst_25 : f32 to vector<8x17xf32>
    %75 = tpu.concatenate %73, %74 in 1 : vector<8x239xf32>, vector<8x17xf32> -> vector<8x256xf32>
    %c15_i32_26 = arith.constant 15 : i32
    %76 = vector.broadcast %c15_i32_26 : i32 to vector<1x256xi32>
    %77 = arith.cmpi slt, %16, %76 : vector<1x256xi32>
    %cst_27 = arith.constant 0.000000e+00 : f32
    %78 = vector.shape_cast %77 : vector<1x256xi1> to vector<1x256xi1>
    %79 = vector.broadcast %78 : vector<1x256xi1> to vector<8x256xi1>
    %80 = vector.broadcast %cst_27 : f32 to vector<8x256xf32>
    %81 = arith.select %79, %75, %80 : vector<8x256xi1>, vector<8x256xf32>
    %82 = tpu.concatenate %30, %33, %42, %51, %20, %60, %69, %72, %81 in 0 : vector<8x256xf32>, vector<8x256xf32>, vector<8x256xf32>, vector<8x256xf32>, vector<8x256xf32>, vector<8x256xf32>, vector<8x256xf32>, vector<8x256xf32>, vector<8x256xf32> -> vector<72x256xf32>
    %cst_28 = arith.constant dense<0.000000e+00> : vector<4x256xf32>
    %83 = tpu.matmul %21, %82, %cst_28 {dimension_numbers = #tpu.dot_dimension_numbers<[1], [0], [0], [1], [0, 0, 1, 1], [], []>} : vector<4x72xf32>, vector<72x256xf32>, vector<4x256xf32> -> vector<4x256xf32>
    %c0_29 = arith.constant 0 : index
    %c0_30 = arith.constant 0 : index
    %c0_31 = arith.constant 0 : index
    %84 = vector.load %arg2[%c0_29, %c0_30, %c0_31] : memref<1x4x400xf32, #tpu.memory_space<vmem>>, vector<1x4x400xf32>
    %85 = vector.shape_cast %84 : vector<1x4x400xf32> to vector<4x400xf32>
    %86 = vector.extract_strided_slice %85 {offsets = [0, 42], sizes = [4, 16], strides = [1, 1]} : vector<4x400xf32> to vector<4x16xf32>
    %87 = vector.extract_strided_slice %85 {offsets = [0, 62], sizes = [4, 16], strides = [1, 1]} : vector<4x400xf32> to vector<4x16xf32>
    %88 = vector.extract_strided_slice %85 {offsets = [0, 82], sizes = [4, 16], strides = [1, 1]} : vector<4x400xf32> to vector<4x16xf32>
    %89 = vector.extract_strided_slice %85 {offsets = [0, 102], sizes = [4, 16], strides = [1, 1]} : vector<4x400xf32> to vector<4x16xf32>
    %90 = vector.extract_strided_slice %85 {offsets = [0, 122], sizes = [4, 16], strides = [1, 1]} : vector<4x400xf32> to vector<4x16xf32>
    %91 = vector.extract_strided_slice %85 {offsets = [0, 142], sizes = [4, 16], strides = [1, 1]} : vector<4x400xf32> to vector<4x16xf32>
    %92 = vector.extract_strided_slice %85 {offsets = [0, 162], sizes = [4, 16], strides = [1, 1]} : vector<4x400xf32> to vector<4x16xf32>
    %93 = vector.extract_strided_slice %85 {offsets = [0, 182], sizes = [4, 16], strides = [1, 1]} : vector<4x400xf32> to vector<4x16xf32>
    %94 = vector.extract_strided_slice %85 {offsets = [0, 202], sizes = [4, 16], strides = [1, 1]} : vector<4x400xf32> to vector<4x16xf32>
    %95 = vector.extract_strided_slice %85 {offsets = [0, 222], sizes = [4, 16], strides = [1, 1]} : vector<4x400xf32> to vector<4x16xf32>
    %96 = vector.extract_strided_slice %85 {offsets = [0, 242], sizes = [4, 16], strides = [1, 1]} : vector<4x400xf32> to vector<4x16xf32>
    %97 = vector.extract_strided_slice %85 {offsets = [0, 262], sizes = [4, 16], strides = [1, 1]} : vector<4x400xf32> to vector<4x16xf32>
    %98 = vector.extract_strided_slice %85 {offsets = [0, 282], sizes = [4, 16], strides = [1, 1]} : vector<4x400xf32> to vector<4x16xf32>
    %99 = vector.extract_strided_slice %85 {offsets = [0, 302], sizes = [4, 16], strides = [1, 1]} : vector<4x400xf32> to vector<4x16xf32>
    %100 = vector.extract_strided_slice %85 {offsets = [0, 322], sizes = [4, 16], strides = [1, 1]} : vector<4x400xf32> to vector<4x16xf32>
    %101 = vector.extract_strided_slice %85 {offsets = [0, 342], sizes = [4, 16], strides = [1, 1]} : vector<4x400xf32> to vector<4x16xf32>
    %102 = tpu.concatenate %86, %87, %88, %89, %90, %91, %92, %93, %94, %95, %96, %97, %98, %99, %100, %101 in 1 : vector<4x16xf32>, vector<4x16xf32>, vector<4x16xf32>, vector<4x16xf32>, vector<4x16xf32>, vector<4x16xf32>, vector<4x16xf32>, vector<4x16xf32>, vector<4x16xf32>, vector<4x16xf32>, vector<4x16xf32>, vector<4x16xf32>, vector<4x16xf32>, vector<4x16xf32>, vector<4x16xf32>, vector<4x16xf32> -> vector<4x256xf32>
    %103 = tpu.concatenate %83, %102 in 0 : vector<4x256xf32>, vector<4x256xf32> -> vector<8x256xf32>
    %c0_32 = arith.constant 0 : index
    %c0_33 = arith.constant 0 : index
    %104 = vector.load %arg5[%c0_32, %c0_33] : memref<4x72xf32, #tpu.memory_space<vmem>>, vector<4x72xf32>
    %cst_34 = arith.constant 0.000000e+00 : f32
    %105 = vector.broadcast %cst_34 : f32 to vector<8x17xf32>
    %106 = vector.extract_strided_slice %103 {offsets = [0, 0], sizes = [8, 239], strides = [1, 1]} : vector<8x256xf32> to vector<8x239xf32>
    %107 = tpu.concatenate %105, %106 in 1 : vector<8x17xf32>, vector<8x239xf32> -> vector<8x256xf32>
    %c1_i32_35 = arith.constant 1 : i32
    %108 = vector.broadcast %c1_i32_35 : i32 to vector<1x256xi32>
    %109 = arith.cmpi sge, %16, %108 : vector<1x256xi32>
    %cst_36 = arith.constant 0.000000e+00 : f32
    %110 = vector.shape_cast %109 : vector<1x256xi1> to vector<1x256xi1>
    %111 = vector.broadcast %110 : vector<1x256xi1> to vector<8x256xi1>
    %112 = vector.broadcast %cst_36 : f32 to vector<8x256xf32>
    %113 = arith.select %111, %107, %112 : vector<8x256xi1>, vector<8x256xf32>
    %cst_37 = arith.constant 0.000000e+00 : f32
    %114 = vector.broadcast %cst_37 : f32 to vector<8x16xf32>
    %115 = vector.extract_strided_slice %103 {offsets = [0, 0], sizes = [8, 240], strides = [1, 1]} : vector<8x256xf32> to vector<8x240xf32>
    %116 = tpu.concatenate %114, %115 in 1 : vector<8x16xf32>, vector<8x240xf32> -> vector<8x256xf32>
    %cst_38 = arith.constant 0.000000e+00 : f32
    %117 = vector.broadcast %cst_38 : f32 to vector<8x15xf32>
    %118 = vector.extract_strided_slice %103 {offsets = [0, 0], sizes = [8, 241], strides = [1, 1]} : vector<8x256xf32> to vector<8x241xf32>
    %119 = tpu.concatenate %117, %118 in 1 : vector<8x15xf32>, vector<8x241xf32> -> vector<8x256xf32>
    %c15_i32_39 = arith.constant 15 : i32
    %120 = vector.broadcast %c15_i32_39 : i32 to vector<1x256xi32>
    %121 = arith.cmpi slt, %16, %120 : vector<1x256xi32>
    %cst_40 = arith.constant 0.000000e+00 : f32
    %122 = vector.shape_cast %121 : vector<1x256xi1> to vector<1x256xi1>
    %123 = vector.broadcast %122 : vector<1x256xi1> to vector<8x256xi1>
    %124 = vector.broadcast %cst_40 : f32 to vector<8x256xf32>
    %125 = arith.select %123, %119, %124 : vector<8x256xi1>, vector<8x256xf32>
    %cst_41 = arith.constant 0.000000e+00 : f32
    %126 = vector.broadcast %cst_41 : f32 to vector<8x1xf32>
    %127 = vector.extract_strided_slice %103 {offsets = [0, 0], sizes = [8, 255], strides = [1, 1]} : vector<8x256xf32> to vector<8x255xf32>
    %128 = tpu.concatenate %126, %127 in 1 : vector<8x1xf32>, vector<8x255xf32> -> vector<8x256xf32>
    %c1_i32_42 = arith.constant 1 : i32
    %129 = vector.broadcast %c1_i32_42 : i32 to vector<1x256xi32>
    %130 = arith.cmpi sge, %16, %129 : vector<1x256xi32>
    %cst_43 = arith.constant 0.000000e+00 : f32
    %131 = vector.shape_cast %130 : vector<1x256xi1> to vector<1x256xi1>
    %132 = vector.broadcast %131 : vector<1x256xi1> to vector<8x256xi1>
    %133 = vector.broadcast %cst_43 : f32 to vector<8x256xf32>
    %134 = arith.select %132, %128, %133 : vector<8x256xi1>, vector<8x256xf32>
    %135 = vector.extract_strided_slice %103 {offsets = [0, 1], sizes = [8, 255], strides = [1, 1]} : vector<8x256xf32> to vector<8x255xf32>
    %cst_44 = arith.constant 0.000000e+00 : f32
    %136 = vector.broadcast %cst_44 : f32 to vector<8x1xf32>
    %137 = tpu.concatenate %135, %136 in 1 : vector<8x255xf32>, vector<8x1xf32> -> vector<8x256xf32>
    %c15_i32_45 = arith.constant 15 : i32
    %138 = vector.broadcast %c15_i32_45 : i32 to vector<1x256xi32>
    %139 = arith.cmpi slt, %16, %138 : vector<1x256xi32>
    %cst_46 = arith.constant 0.000000e+00 : f32
    %140 = vector.shape_cast %139 : vector<1x256xi1> to vector<1x256xi1>
    %141 = vector.broadcast %140 : vector<1x256xi1> to vector<8x256xi1>
    %142 = vector.broadcast %cst_46 : f32 to vector<8x256xf32>
    %143 = arith.select %141, %137, %142 : vector<8x256xi1>, vector<8x256xf32>
    %144 = vector.extract_strided_slice %103 {offsets = [0, 15], sizes = [8, 241], strides = [1, 1]} : vector<8x256xf32> to vector<8x241xf32>
    %cst_47 = arith.constant 0.000000e+00 : f32
    %145 = vector.broadcast %cst_47 : f32 to vector<8x15xf32>
    %146 = tpu.concatenate %144, %145 in 1 : vector<8x241xf32>, vector<8x15xf32> -> vector<8x256xf32>
    %c1_i32_48 = arith.constant 1 : i32
    %147 = vector.broadcast %c1_i32_48 : i32 to vector<1x256xi32>
    %148 = arith.cmpi sge, %16, %147 : vector<1x256xi32>
    %cst_49 = arith.constant 0.000000e+00 : f32
    %149 = vector.shape_cast %148 : vector<1x256xi1> to vector<1x256xi1>
    %150 = vector.broadcast %149 : vector<1x256xi1> to vector<8x256xi1>
    %151 = vector.broadcast %cst_49 : f32 to vector<8x256xf32>
    %152 = arith.select %150, %146, %151 : vector<8x256xi1>, vector<8x256xf32>
    %153 = vector.extract_strided_slice %103 {offsets = [0, 16], sizes = [8, 240], strides = [1, 1]} : vector<8x256xf32> to vector<8x240xf32>
    %cst_50 = arith.constant 0.000000e+00 : f32
    %154 = vector.broadcast %cst_50 : f32 to vector<8x16xf32>
    %155 = tpu.concatenate %153, %154 in 1 : vector<8x240xf32>, vector<8x16xf32> -> vector<8x256xf32>
    %156 = vector.extract_strided_slice %103 {offsets = [0, 17], sizes = [8, 239], strides = [1, 1]} : vector<8x256xf32> to vector<8x239xf32>
    %cst_51 = arith.constant 0.000000e+00 : f32
    %157 = vector.broadcast %cst_51 : f32 to vector<8x17xf32>
    %158 = tpu.concatenate %156, %157 in 1 : vector<8x239xf32>, vector<8x17xf32> -> vector<8x256xf32>
    %c15_i32_52 = arith.constant 15 : i32
    %159 = vector.broadcast %c15_i32_52 : i32 to vector<1x256xi32>
    %160 = arith.cmpi slt, %16, %159 : vector<1x256xi32>
    %cst_53 = arith.constant 0.000000e+00 : f32
    %161 = vector.shape_cast %160 : vector<1x256xi1> to vector<1x256xi1>
    %162 = vector.broadcast %161 : vector<1x256xi1> to vector<8x256xi1>
    %163 = vector.broadcast %cst_53 : f32 to vector<8x256xf32>
    %164 = arith.select %162, %158, %163 : vector<8x256xi1>, vector<8x256xf32>
    %165 = tpu.concatenate %113, %116, %125, %134, %103, %143, %152, %155, %164 in 0 : vector<8x256xf32>, vector<8x256xf32>, vector<8x256xf32>, vector<8x256xf32>, vector<8x256xf32>, vector<8x256xf32>, vector<8x256xf32>, vector<8x256xf32>, vector<8x256xf32> -> vector<72x256xf32>
    %cst_54 = arith.constant dense<0.000000e+00> : vector<4x256xf32>
    %166 = tpu.matmul %104, %165, %cst_54 {dimension_numbers = #tpu.dot_dimension_numbers<[1], [0], [0], [1], [0, 0, 1, 1], [], []>} : vector<4x72xf32>, vector<72x256xf32>, vector<4x256xf32> -> vector<4x256xf32>
    %cst_55 = arith.constant 0.000000e+00 : f32
    %167 = vector.broadcast %cst_55 : f32 to vector<4x256xf32>
    %168 = arith.maximumf %166, %167 : vector<4x256xf32>
    %c0_56 = arith.constant 0 : index
    %c0_57 = arith.constant 0 : index
    %c0_58 = arith.constant 0 : index
    %169 = vector.load %arg6[%c0_56, %c0_57, %c0_58] : memref<1x4x256xf32, #tpu.memory_space<vmem>>, vector<1x4x256xf32>
    %170 = vector.shape_cast %169 : vector<1x4x256xf32> to vector<4x256xf32>
    %171 = vector.shape_cast %168 : vector<4x256xf32> to vector<1x4x256xf32>
    tpu.vector_store %arg6[%c0_56, %c0_57, %c0_58], %171 {strides = array<i32>} : memref<1x4x256xf32, #tpu.memory_space<vmem>>, vector<1x4x256xf32>,
    return
  }
  func.func @transform_0(%arg0: i32) -> (i32, i32, i32) {
    %c0_i32 = arith.constant 0 : i32
    %c0_i32_0 = arith.constant 0 : i32
    %c0_i32_1 = arith.constant 0 : i32
    return %arg0, %c0_i32, %c0_i32_0 : i32, i32, i32
  }
  func.func @transform_1(%arg0: i32) -> (i32, i32, i32) {
    %c0_i32 = arith.constant 0 : i32
    %c0_i32_0 = arith.constant 0 : i32
    %c0_i32_1 = arith.constant 0 : i32
    return %arg0, %c0_i32, %c0_i32_0 : i32, i32, i32
  }
  func.func @transform_2(%arg0: i32) -> (i32, i32) {
    %c0_i32 = arith.constant 0 : i32
    %c0_i32_0 = arith.constant 0 : i32
    %c0_i32_1 = arith.constant 0 : i32
    return %c0_i32, %c0_i32_0 : i32, i32
  }
  func.func @transform_3(%arg0: i32) -> (i32, i32) {
    %c0_i32 = arith.constant 0 : i32
    %c0_i32_0 = arith.constant 0 : i32
    %c0_i32_1 = arith.constant 0 : i32
    return %c0_i32, %c0_i32_0 : i32, i32
  }
  func.func @transform_4(%arg0: i32) -> (i32, i32) {
    %c0_i32 = arith.constant 0 : i32
    %c0_i32_0 = arith.constant 0 : i32
    %c0_i32_1 = arith.constant 0 : i32
    return %c0_i32, %c0_i32_0 : i32, i32
  }
  func.func @transform_5(%arg0: i32) -> (i32, i32, i32) {
    %c0_i32 = arith.constant 0 : i32
    %c0_i32_0 = arith.constant 0 : i32
    %c0_i32_1 = arith.constant 0 : i32
    return %arg0, %c0_i32, %c0_i32_0 : i32, i32, i32
  }
}

</mosaic_0001>

<llo_original>
// kernel: tpu_custom_call.1
$region0: #{tpu_custom_call.1}
  #allocation0 [shape = 'u32[]', space=smem, size = 0x4, offset = 0x4, fixed_abs, tag = 'smem constant byte address 0x4 - core index']
  #allocation1 [shape = 'u32[144,128]{1,0:T(1,128)}', space=vmem, size = 0x12000, scoped, tag = 'internal scratch']
  %s0 = inlined_call_operand.hbm [shape: f32[2,8,64], index: 0, kind: input, shape index: {}]
  %s1 = inlined_call_operand.hbm [shape: f32[2,4,400], index: 1, kind: input, shape index: {}]
  %s2 = inlined_call_operand.hbm [shape: f32[64,256], index: 2, kind: input, shape index: {}]
  %s3 = inlined_call_operand.vmem [shape: f32[4,72], index: 3, kind: input, shape index: {}]
  %s4 = inlined_call_operand.vmem [shape: f32[4,72], index: 4, kind: input, shape index: {}]
  %s5 = inlined_call_operand.hbm [shape: f32[2,4,256], index: 5, kind: output, shape index: {}]
  %s6 = sld [smem:[#allocation0]]
  $region65: #{tpu_custom_call.1} parent=0
    _
  %s8 = ssub.s32 1, %s6
  %s9 = scalar_select 0, %s8, %s6
  $region1: #{tpu_custom_call.1} parent=0
    #allocation2 [shape = 'u8[8192]{0}', space=vmem, size = 0x2000, scoped, tag = 'input window, operand 0']
    #allocation3 [shape = 's32[2]{0}', space=sflag, size = 0x8, scoped, tag = 'scoped memory for tpu_custom_call.1']
    #allocation4 [shape = 's32[2]{0}', space=sflag, size = 0x8, scoped, tag = 'scoped memory for tpu_custom_call.1']
    #allocation5 [shape = 'u8[16384]{0}', space=vmem, size = 0x4000, scoped, tag = 'input window, operand 1']
    #allocation6 [shape = 's32[2]{0}', space=sflag, size = 0x8, scoped, tag = 'scoped memory for tpu_custom_call.1']
    #allocation7 [shape = 'u8[65536]{0}', space=vmem, size = 0x10000, scoped, tag = 'input window, operand 2, single buffered']
    #allocation8 [shape = 'u8[8192]{0}', space=vmem, size = 0x2000, scoped, tag = 'output window, operand 0']
    %10 = vsyncpa [#allocation3], 0
    %s11 = scalar_lea.sflag [#allocation3], 1
    %12 = vsyncpa %s11, 0
    %13 = vsyncpa [#allocation6], 0
    %s14 = scalar_lea.sflag [#allocation6], 1
    %15 = vsyncpa %s14, 0
    %16 = vsyncpa [#allocation4], 0
    %s17 = scalar_lea.sflag [#allocation4], 1
    %18 = vsyncpa %s17, 0
    loop: start=0, step=1, limit=4
    $region2: #{tpu_custom_call.1} parent=1 // loop_pre_header
      _
    $region3: #{tpu_custom_call.1} parent=1 // loop_header
      %s20 = sphi 0, %s24
      %p21 = scmp.ge.s32.totalorder %s20, 4
      %s30 = sphi 0, %s32
      %s33 = sphi 0, %s30
      %s34 = sphi 0, %s33
      %s50 = sphi 0, %s34
      %s56 = sphi 0, %s58
      %s59 = sphi 0, %s56
      %s60 = sphi 0, %s59
      %s76 = sphi 0, %s60
      %s80 = sphi 0, %s80
      %s82 = sphi 0, %s80
      %s83 = sphi 0, %s82
      %s97 = sphi 0, %s83
      %s101 = sphi 0, %s101
      %s103 = sphi 0, %s101
      %s104 = sphi 0, %s103
      %s118 = sphi 0, %s104
      %s122 = sphi 0, %s122
      %s124 = sphi 0, %s122
      %s125 = sphi 0, %s124
      %s139 = sphi 0, %s125
      %s145 = sphi 0, %s147
      %s148 = sphi 0, %s145
      %s149 = sphi 0, %s148
      %s165 = sphi 0, %s149
    $region4: #{tpu_custom_call.1} parent=1 // loop_header_branch
      %23 = sbr.rel (%p21) target = $region8
    $region5: #{tpu_custom_call.1} parent=1 // loop_body
      %s25 = ssub.s32 %s20, 1
      %s26 = ssub.s32 %s20, 2
      %s27 = sadd.s32 %s20, 1
      %s28 = ssub.s32 %s20, %s27
      %p29 = scmp.eq.s32.totalorder %s28, 0
      %s31 = sadd.s32 %s30, 1
      %s32 = scalar_select %p29, %s30, %s31
      %p35 = pneg %p29
      %p36 = scmp.eq.s32.totalorder %s20, 1
      %p37 = por %p35, %p36
      %p38 = scmp.ne.s32.totalorder %s30, %s33
      %p39 = scmp.eq.s32.totalorder %s20, 0
      %p40 = por %p38, %p39
      %p41 = scmp.ne.s32.totalorder %s30, %s33
      %p42 = scmp.eq.s32.totalorder %s25, 1
      %p43 = por %p41, %p42
      %p44 = scmp.ne.s32.totalorder %s33, %s34
      %p45 = scmp.eq.s32.totalorder %s25, 0
      %p46 = por %p44, %p45
      %p47 = scmp.ne.s32.totalorder %s33, %s34
      %p48 = scmp.eq.s32.totalorder %s26, 1
      %p49 = por %p47, %p48
      %p51 = scmp.ne.s32.totalorder %s34, %s50
      %p52 = scmp.eq.s32.totalorder %s26, 0
      %p53 = por %p51, %p52
      %s54 = ssub.s32 %s20, %s27
      %p55 = scmp.eq.s32.totalorder %s54, 0
      %s57 = sadd.s32 %s56, 1
      %s58 = scalar_select %p55, %s56, %s57
      %p61 = pneg %p55
      %p62 = scmp.eq.s32.totalorder %s20, 1
      %p63 = por %p61, %p62
      %p64 = scmp.ne.s32.totalorder %s56, %s59
      %p65 = scmp.eq.s32.totalorder %s20, 0
      %p66 = por %p64, %p65
      %p67 = scmp.ne.s32.totalorder %s56, %s59
      %p68 = scmp.eq.s32.totalorder %s25, 1
      %p69 = por %p67, %p68
      %p70 = scmp.ne.s32.totalorder %s59, %s60
      %p71 = scmp.eq.s32.totalorder %s25, 0
      %p72 = por %p70, %p71
      %p73 = scmp.ne.s32.totalorder %s59, %s60
      %p74 = scmp.eq.s32.totalorder %s26, 1
      %p75 = por %p73, %p74
      %p77 = scmp.ne.s32.totalorder %s60, %s76
      %p78 = scmp.eq.s32.totalorder %s26, 0
      %p79 = por %p77, %p78
      %s81 = sadd.s32 %s80, 1
      %p84 = scmp.eq.s32.totalorder %s20, 1
      %p85 = scmp.ne.s32.totalorder %s80, %s82
      %p86 = scmp.eq.s32.totalorder %s20, 0
      %p87 = por %p85, %p86
      %p88 = scmp.ne.s32.totalorder %s80, %s82
      %p89 = scmp.eq.s32.totalorder %s25, 1
      %p90 = por %p88, %p89
      %p91 = scmp.ne.s32.totalorder %s82, %s83
      %p92 = scmp.eq.s32.totalorder %s25, 0
      %p93 = por %p91, %p92
      %p94 = scmp.ne.s32.totalorder %s82, %s83
      %p95 = scmp.eq.s32.totalorder %s26, 1
      %p96 = por %p94, %p95
      %p98 = scmp.ne.s32.totalorder %s83, %s97
      %p99 = scmp.eq.s32.totalorder %s26, 0
      %p100 = por %p98, %p99
      %s102 = sadd.s32 %s101, 1
      %p105 = scmp.eq.s32.totalorder %s20, 1
      %p106 = scmp.ne.s32.totalorder %s101, %s103
      %p107 = scmp.eq.s32.totalorder %s20, 0
      %p108 = por %p106, %p107
      %p109 = scmp.ne.s32.totalorder %s101, %s103
      %p110 = scmp.eq.s32.totalorder %s25, 1
      %p111 = por %p109, %p110
      %p112 = scmp.ne.s32.totalorder %s103, %s104
      %p113 = scmp.eq.s32.totalorder %s25, 0
      %p114 = por %p112, %p113
      %p115 = scmp.ne.s32.totalorder %s103, %s104
      %p116 = scmp.eq.s32.totalorder %s26, 1
      %p117 = por %p115, %p116
      %p119 = scmp.ne.s32.totalorder %s104, %s118
      %p120 = scmp.eq.s32.totalorder %s26, 0
      %p121 = por %p119, %p120
      %s123 = sadd.s32 %s122, 1
      %p126 = scmp.eq.s32.totalorder %s20, 1
      %p127 = scmp.ne.s32.totalorder %s122, %s124
      %p128 = scmp.eq.s32.totalorder %s20, 0
      %p129 = por %p127, %p128
      %p130 = scmp.ne.s32.totalorder %s122, %s124
      %p131 = scmp.eq.s32.totalorder %s25, 1
      %p132 = por %p130, %p131
      %p133 = scmp.ne.s32.totalorder %s124, %s125
      %p134 = scmp.eq.s32.totalorder %s25, 0
      %p135 = por %p133, %p134
      %p136 = scmp.ne.s32.totalorder %s124, %s125
      %p137 = scmp.eq.s32.totalorder %s26, 1
      %p138 = por %p136, %p137
      %p140 = scmp.ne.s32.totalorder %s125, %s139
      %p141 = scmp.eq.s32.totalorder %s26, 0
      %p142 = por %p140, %p141
      %s143 = ssub.s32 %s20, %s27
      %p144 = scmp.eq.s32.totalorder %s143, 0
      %s146 = sadd.s32 %s145, 1
      %s147 = scalar_select %p144, %s145, %s146
      %p150 = pneg %p144
      %p151 = scmp.eq.s32.totalorder %s20, 1
      %p152 = por %p150, %p151
      %p153 = scmp.ne.s32.totalorder %s145, %s148
      %p154 = scmp.eq.s32.totalorder %s20, 0
      %p155 = por %p153, %p154
      %p156 = scmp.ne.s32.totalorder %s145, %s148
      %p157 = scmp.eq.s32.totalorder %s25, 1
      %p158 = por %p156, %p157
      %p159 = scmp.ne.s32.totalorder %s148, %s149
      %p160 = scmp.eq.s32.totalorder %s25, 0
      %p161 = por %p159, %p160
      %p162 = scmp.ne.s32.totalorder %s148, %s149
      %p163 = scmp.eq.s32.totalorder %s26, 1
      %p164 = por %p162, %p163
      %p166 = scmp.ne.s32.totalorder %s149, %s165
      %p167 = scmp.eq.s32.totalorder %s26, 0
      %p168 = por %p166, %p167
      %p169 = scmp.le.s32.totalorder 1, %s20
      %p170 = scmp.lt.s32.totalorder %s20, 3
      %p171 = pnand %p169, %p170
      %p172 = pneg %p171
      // Predicated region
      $region9: #{tpu_custom_call.1} parent=5 // pred_check
        _
      $region10: #{tpu_custom_call.1} parent=5 // pred_check_branch
        %174 = sbr.rel (%p171) target = $region12
      $region11: #{tpu_custom_call.1} parent=5 // pred_region
        %s175 = ssub.s32 %s20, 1
        // Predicated region
        $region13: #{tpu_custom_call.1} parent=11 // pred_check
          %p176 = pneg %p93
        $region14: #{tpu_custom_call.1} parent=11 // pred_check_branch
          %178 = sbr.rel (%p176) target = $region16
        $region15: #{tpu_custom_call.1} parent=11 // pred_region
          %s180 = ssub.s32 2048, 2048
          %181 = vsyncadd [#allocation6], %s180
          %s182 = sshll.u32 [#allocation7], 4
          %s183 = int_to_ptr.vmem [resolvable:$true] %s182
          %188 = dma.hbm_to_vmem [thread:$0]  %s2, 2048, %s183, [#allocation6], 256, 256, 16
        $region16: #{tpu_custom_call.1} parent=11 // pred_fallthru
          _
        // Predicated region
        $region17: #{tpu_custom_call.1} parent=11 // pred_check
          %p189 = pneg %p114
        $region18: #{tpu_custom_call.1} parent=11 // pred_check_branch
          %191 = sbr.rel (%p189) target = $region20
        $region19: #{tpu_custom_call.1} parent=11 // pred_region
          _
        $region20: #{tpu_custom_call.1} parent=11 // pred_fallthru
          _
        // Predicated region
        $region21: #{tpu_custom_call.1} parent=11 // pred_check
          %p192 = pneg %p135
        $region22: #{tpu_custom_call.1} parent=11 // pred_check_branch
          %194 = sbr.rel (%p192) target = $region24
        $region23: #{tpu_custom_call.1} parent=11 // pred_region
          _
        $region24: #{tpu_custom_call.1} parent=11 // pred_fallthru
          _
      $region12: #{tpu_custom_call.1} parent=5 // pred_fallthru
        _
      %p195 = scmp.lt.s32.totalorder %s20, 2
      // Predicated region
      $region25: #{tpu_custom_call.1} parent=5 // pred_check
        %p196 = pneg %p195
      $region26: #{tpu_custom_call.1} parent=5 // pred_check_branch
        %198 = sbr.rel (%p196) target = $region28
      $region27: #{tpu_custom_call.1} parent=5 // pred_region
        // Predicated region
        $region29: #{tpu_custom_call.1} parent=27 // pred_check
          %p199 = pneg %p40
        $region30: #{tpu_custom_call.1} parent=27 // pred_check_branch
          %201 = sbr.rel (%p199) target = $region32
        $region31: #{tpu_custom_call.1} parent=27 // pred_region
          %s202 = sand.u32 %s30, 1
          %s203 = scalar_lea.sflag [#allocation3], %s202
          %s204 = sand.u32 %s30, 1
          %s205 = smul.addr %s204, 8
          %s206 = scalar_lea.vmem [#allocation2], %s205
          %s208 = ssub.s32 128, 128
          %209 = vsyncadd %s203, %s208
          %s210 = smul.addr %s20, 128
          %s211 = scalar_lea.hbm %s0, %s210
          %s213 = sshll.u32 %s206, 4
          %s214 = int_to_ptr.vmem [resolvable:$true] %s213
          %216 = dma.hbm_to_vmem [thread:$0]  %s211, 128, %s214, %s203
        $region32: #{tpu_custom_call.1} parent=27 // pred_fallthru
          _
        // Predicated region
        $region33: #{tpu_custom_call.1} parent=27 // pred_check
          %p217 = pneg %p66
        $region34: #{tpu_custom_call.1} parent=27 // pred_check_branch
          %219 = sbr.rel (%p217) target = $region36
        $region35: #{tpu_custom_call.1} parent=27 // pred_region
          %s220 = sand.u32 %s20, 1
          %s221 = scalar_lea.sflag [#allocation6], %s220
          %s222 = sand.u32 %s56, 1
          %s223 = smul.addr %s222, 16
          %s224 = scalar_lea.vmem [#allocation5], %s223
          %s226 = ssub.s32 256, 256
          %227 = vsyncadd %s221, %s226
          %s228 = smul.addr %s20, 4
          %s229 = smul.addr %s228, 64
          %s230 = scalar_lea.hbm %s1, %s229
          %s232 = sshll.u32 %s224, 4
          %s233 = int_to_ptr.vmem [resolvable:$true] %s232
          %235 = dma.hbm_to_vmem [thread:$0]  %s230, 256, %s233, %s221
        $region36: #{tpu_custom_call.1} parent=27 // pred_fallthru
          _
      $region28: #{tpu_custom_call.1} parent=5 // pred_fallthru
        _
      %p236 = scmp.le.s32.totalorder 1, %s20
      %p237 = scmp.lt.s32.totalorder %s20, 3
      %p238 = pnand %p236, %p237
      %p239 = pneg %p238
      // Predicated region
      $region37: #{tpu_custom_call.1} parent=5 // pred_check
        _
      $region38: #{tpu_custom_call.1} parent=5 // pred_check_branch
        %241 = sbr.rel (%p238) target = $region40
      $region39: #{tpu_custom_call.1} parent=5 // pred_region
        %s242 = ssub.s32 %s20, 1
        %s243 = sand.u32 %s33, 1
        %s244 = scalar_lea.sflag [#allocation3], %s243
        %s245 = sand.u32 %s33, 1
        %s246 = smul.addr %s245, 8
        %s247 = scalar_lea.vmem [#allocation2], %s246
        // Predicated region
        $region41: #{tpu_custom_call.1} parent=39 // pred_check
          %p248 = pneg %p46
        $region42: #{tpu_custom_call.1} parent=39 // pred_check_branch
          %250 = sbr.rel (%p248) target = $region44
        $region43: #{tpu_custom_call.1} parent=39 // pred_region
          %251 = dma.done %s244, 128
        $region44: #{tpu_custom_call.1} parent=39 // pred_fallthru
          _
        %s252 = sand.u32 %s25, 1
        %s253 = scalar_lea.sflag [#allocation6], %s252
        %s254 = sand.u32 %s59, 1
        %s255 = smul.addr %s254, 16
        %s256 = scalar_lea.vmem [#allocation5], %s255
        // Predicated region
        $region45: #{tpu_custom_call.1} parent=39 // pred_check
          %p257 = pneg %p72
        $region46: #{tpu_custom_call.1} parent=39 // pred_check_branch
          %259 = sbr.rel (%p257) target = $region48
        $region47: #{tpu_custom_call.1} parent=39 // pred_region
          %260 = dma.done %s253, 256
        $region48: #{tpu_custom_call.1} parent=39 // pred_fallthru
          _
        // Predicated region
        $region49: #{tpu_custom_call.1} parent=39 // pred_check
          %p261 = pneg %p93
        $region50: #{tpu_custom_call.1} parent=39 // pred_check_branch
          %263 = sbr.rel (%p261) target = $region52
        $region51: #{tpu_custom_call.1} parent=39 // pred_region
          %264 = dma.done [#allocation6], 2048
        $region52: #{tpu_custom_call.1} parent=39 // pred_fallthru
          _
        %s265 = sand.u32 %s33, 1
        %s266 = scalar_lea.sflag [#allocation3], %s265
        %s267 = sand.u32 %s33, 1
        %s268 = smul.addr %s267, 8
        %s269 = scalar_lea.vmem [#allocation2], %s268
        %p270 = pneg %p46
        %p271 = pneg %p43
        %s272 = sand.u32 %s25, 1
        %s273 = scalar_lea.sflag [#allocation6], %s272
        %s274 = sand.u32 %s59, 1
        %s275 = smul.addr %s274, 16
        %s276 = scalar_lea.vmem [#allocation5], %s275
        %p277 = pneg %p72
        %p278 = pneg %p69
        %p279 = pneg %p93
        %p280 = pneg %p90
        %p281 = pneg %p114
        %p282 = pneg %p111
        %p283 = pneg %p135
        %p284 = pneg %p132
        %p285 = pneg %p161
        %p286 = pneg %p158
        %s287 = sand.u32 %s148, 1
        %s288 = scalar_lea.sflag [#allocation4], %s287
        %s289 = sand.u32 %s148, 1
        %s290 = smul.addr %s289, 8
        %s291 = scalar_lea.vmem [#allocation8], %s290
        %v292 = vlaneseq
        %v293 = vand.u32 %v292, 127
        %v294 = vadd.s32 %v293, 128
        %vm295 = vcmp.lt.s32.totalorder %v293, 0
        %v296 = vsub.s32 0, %v293
        %v297 = vsel %vm295, %v296, %v293
        %v298 = vshrl.u32 %v297, 4
        %v299 = vand.u32 %v297, 15
        %v300 = vsub.s32 0, %v299
        %v301 = vsel %vm295, %v300, %v299
        %vm302 = vcmp.lt.s32.totalorder %v294, 0
        %v303 = vsub.s32 0, %v294
        %v304 = vsel %vm302, %v303, %v294
        %v305 = vshrl.u32 %v304, 4
        %v306 = vand.u32 %v304, 15
        %v307 = vsub.s32 0, %v306
        %v308 = vsel %vm302, %v307, %v306
        %vm309 = vcmp.ne.s32.totalorder %v301, 0
        %vm310 = vcmp.ne.s32.totalorder %v308, 0
        %vm311 = vcmp.lt.s32.totalorder %v301, 0
        %vm312 = vcmp.lt.s32.totalorder %v308, 0
        %vm313 = vmand %vm311, %vm309
        %vm314 = vmand %vm312, %vm310
        %v315 = vadd.s32 %v301, 16
        %v316 = vadd.s32 %v308, 16
        %v317 = vsel %vm313, %v315, %v301
        %v318 = vsel %vm314, %v316, %v308
        %v319 = vld [vmem:[%s247] sm:$0xff]
        %v320 = vld [vmem:[#allocation7] sm:$0xff]
        %v321 = vld [vmem:[#allocation7 + $0x8] sm:$0xff]
        %v322 = vld [vmem:[#allocation7 + $0x10] sm:$0xff]
        %v323 = vld [vmem:[#allocation7 + $0x18] sm:$0xff]
        %v324 = vld [vmem:[#allocation7 + $0x20] sm:$0xff]
        %v325 = vld [vmem:[#allocation7 + $0x28] sm:$0xff]
        %v326 = vld [vmem:[#allocation7 + $0x30] sm:$0xff]
        %v327 = vld [vmem:[#allocation7 + $0x38] sm:$0xff]
        %v328 = vld [vmem:[#allocation7 + $0x40] sm:$0xff]
        %v329 = vld [vmem:[#allocation7 + $0x48] sm:$0xff]
        %v330 = vld [vmem:[#allocation7 + $0x50] sm:$0xff]
        %v331 = vld [vmem:[#allocation7 + $0x58] sm:$0xff]
        %v332 = vld [vmem:[#allocation7 + $0x60] sm:$0xff]
        %v333 = vld [vmem:[#allocation7 + $0x68] sm:$0xff]
        %v334 = vld [vmem:[#allocation7 + $0x70] sm:$0xff]
        %v335 = vld [vmem:[#allocation7 + $0x78] sm:$0xff]
        %vm336 = vcmask 523264
        %v338 = vsel %vm336, %v319, 0
        %340 = vmatprep.subr.mxu0 %v321
        %341 = vmatpush1.msra.mxu0 %v320
        %342 = vmatprep.subr.mxu0 %v323
        %343 = vmatpush1.msra.mxu0 %v322
        %344 = vmatprep.subr.mxu0 %v325
        %345 = vmatpush1.msra.mxu0 %v324
        %346 = vmatprep.subr.mxu0 %v327
        %347 = vmatpush1.msra.mxu0 %v326
        %348 = vmatprep.subr.mxu0 %v329
        %349 = vmatpush1.msra.mxu0 %v328
        %350 = vmatprep.subr.mxu0 %v331
        %351 = vmatpush1.msra.mxu0 %v330
        %352 = vmatprep.subr.mxu0 %v333
        %353 = vmatpush1.msra.mxu0 %v332
        %354 = vmatprep.subr.mxu0 %v335
        %355 = vmatpush1.msra.mxu0 %v334
        %356 = vmatprep.subr.mxu0 0.0
        %357 = vmatpush1.msra.mxu0 0.0
        %358 = vmatprep.subr.mxu0 0.0
        %359 = vmatpush1.msra.mxu0 0.0
        %360 = vmatprep.subr.mxu0 0.0
        %361 = vmatpush1.msra.mxu0 0.0
        %362 = vmatprep.subr.mxu0 0.0
        %363 = vmatpush1.msra.mxu0 0.0
        %364 = vmatprep.subr.mxu0 0.0
        %365 = vmatpush1.msra.mxu0 0.0
        %366 = vmatprep.subr.mxu0 0.0
        %367 = vmatpush1.msra.mxu0 0.0
        %368 = vmatprep.subr.mxu0 0.0
        %369 = vmatpush1.msra.mxu0 0.0
        %370 = vmatprep.subr.mxu0 0.0
        %371 = vmatpush1.msra.mxu0 0.0
        %372 = vmatprep.subr.mxu0 0.0
        %373 = vmatpush1.msra.mxu0 0.0
        %374 = vmatprep.subr.mxu0 0.0
        %375 = vmatpush1.msra.mxu0 0.0
        %376 = vmatprep.subr.mxu0 0.0
        %377 = vmatpush1.msra.mxu0 0.0
        %378 = vmatprep.subr.mxu0 0.0
        %379 = vmatpush1.msra.mxu0 0.0
        %380 = vmatprep.subr.mxu0 0.0
        %381 = vmatpush1.msra.mxu0 0.0
        %382 = vmatprep.subr.mxu0 0.0
        %383 = vmatpush1.msra.mxu0 0.0
        %384 = vmatprep.subr.mxu0 0.0
        %385 = vmatpush1.msra.mxu0 0.0
        %386 = vmatprep.subr.mxu0 0.0
        %387 = vmatpush1.msra.mxu0 0.0
        %388 = vmatprep.subr.mxu0 0.0
        %389 = vmatpush1.msra.mxu0 0.0
        %390 = vmatprep.subr.mxu0 0.0
        %391 = vmatpush1.msra.mxu0 0.0
        %392 = vmatprep.subr.mxu0 0.0
        %393 = vmatpush1.msra.mxu0 0.0
        %394 = vmatprep.subr.mxu0 0.0
        %395 = vmatpush1.msra.mxu0 0.0
        %396 = vmatprep.subr.mxu0 0.0
        %397 = vmatpush1.msra.mxu0 0.0
        %398 = vmatprep.subr.mxu0 0.0
        %399 = vmatpush1.msra.mxu0 0.0
        %400 = vmatprep.subr.mxu0 0.0
        %401 = vmatpush1.msra.mxu0 0.0
        %402 = vmatprep.subr.mxu0 0.0
        %403 = vmatpush1.msra.mxu0 0.0
        %404 = vmatprep.mubr.f32.mxu0 0.0
        %405 = vmatmul.mubr.f32.gmra.mrb[0].mxu0 %v338
        %v406 = vpop.f32.mrb[0].mxu0
        %v407 = vadd.f32 0.0, %v406
        %v408 = vpop.f32.mrb[0].mxu0
        %v409 = vadd.f32 0.0, %v408
        %410 = vdwg.mxu0
        %v411 = vld [vmem:[%s3] sm:$0xf]
        %414 = vrot.lane.b32.xlu0 %v407, 17
        %v415 = vpop.permute.xlu0 %414
        %416 = vrot.lane.b32.xlu0 %v409, 17
        %v417 = vpop.permute.xlu0 %416
        %vm418 = vcmask 138240
        %v419 = vsel %vm418, %v415, %v417
        %v422 = vsel %vm418, 0.0, %v415
        %vm423 = vcmp.ge.s32.totalorder %v317, 1
        %vm424 = vcmp.ge.s32.totalorder %v318, 1
        %v425 = vsel %vm423, 1, 0
        %v426 = vsel %vm424, 1, 0
        %vm427 = vcmp.eq.s32.totalorder %v425, 1
        %vm428 = vcmp.eq.s32.totalorder %v426, 1
        %v429 = vsel %vm427, %v422, 0.0
        %v430 = vsel %vm428, %v419, 0.0
        %431 = vrot.lane.b32.xlu0 %v407, 16
        %v432 = vpop.permute.xlu0 %431
        %433 = vrot.lane.b32.xlu0 %v409, 16
        %v434 = vpop.permute.xlu0 %433
        %vm435 = vcmask 130048
        %v436 = vsel %vm435, %v432, %v434
        %v439 = vsel %vm435, 0.0, %v432
        %440 = vrot.lane.b32.xlu0 %v407, 15
        %v441 = vpop.permute.xlu0 %440
        %442 = vrot.lane.b32.xlu0 %v409, 15
        %v443 = vpop.permute.xlu0 %442
        %vm444 = vcmask 121856
        %v445 = vsel %vm444, %v441, %v443
        %v448 = vsel %vm444, 0.0, %v441
        %vm449 = vcmp.lt.s32.totalorder %v317, 15
        %vm450 = vcmp.lt.s32.totalorder %v318, 15
        %v451 = vsel %vm449, 1, 0
        %v452 = vsel %vm450, 1, 0
        %vm453 = vcmp.eq.s32.totalorder %v451, 1
        %vm454 = vcmp.eq.s32.totalorder %v452, 1
        %v455 = vsel %vm453, %v448, 0.0
        %v456 = vsel %vm454, %v445, 0.0
        %457 = vrot.lane.b32.xlu0 %v407, 1
        %v458 = vpop.permute.xlu0 %457
        %459 = vrot.lane.b32.xlu0 %v409, 1
        %v460 = vpop.permute.xlu0 %459
        %vm461 = vcmask 7168
        %v462 = vsel %vm461, %v458, %v460
        %v465 = vsel %vm461, 0.0, %v458
        %v466 = vsel %vm427, %v465, 0.0
        %v467 = vsel %vm428, %v462, 0.0
        %468 = vrot.lane.b32.xlu0 %v407, 127
        %v469 = vpop.permute.xlu0 %468
        %470 = vrot.lane.b32.xlu0 %v409, 127
        %v471 = vpop.permute.xlu0 %470
        %vm472 = vcmask 1039360
        %v473 = vsel %vm472, %v469, %v471
        %v476 = vsel %vm472, %v471, 0.0
        %v477 = vsel %vm453, %v473, 0.0
        %v478 = vsel %vm454, %v476, 0.0
        %479 = vrot.lane.b32.xlu0 %v407, 113
        %v480 = vpop.permute.xlu0 %479
        %481 = vrot.lane.b32.xlu0 %v409, 113
        %v482 = vpop.permute.xlu0 %481
        %vm483 = vcmask 924672
        %v484 = vsel %vm483, %v480, %v482
        %v487 = vsel %vm483, %v482, 0.0
        %v488 = vsel %vm427, %v484, 0.0
        %v489 = vsel %vm428, %v487, 0.0
        %490 = vrot.lane.b32.xlu0 %v407, 112
        %v491 = vpop.permute.xlu0 %490
        %492 = vrot.lane.b32.xlu0 %v409, 112
        %v493 = vpop.permute.xlu0 %492
        %vm494 = vcmask 916480
        %v495 = vsel %vm494, %v491, %v493
        %v498 = vsel %vm494, %v493, 0.0
        %499 = vrot.lane.b32.xlu0 %v407, 111
        %v500 = vpop.permute.xlu0 %499
        %501 = vrot.lane.b32.xlu0 %v409, 111
        %v502 = vpop.permute.xlu0 %501
        %vm503 = vcmask 908288
        %v504 = vsel %vm503, %v500, %v502
        %v507 = vsel %vm503, %v502, 0.0
        %v508 = vsel %vm453, %v504, 0.0
        %v509 = vsel %vm454, %v507, 0.0
        %vm510 = vcmask 588800
        %v512 = vsel %vm510, %v411, 0
        %514 = vmatprep.subr.mxu0 %v430
        %515 = vmatpush1.msra.mxu0 %v429
        %516 = vmatprep.subr.mxu0 %v436
        %517 = vmatpush1.msra.mxu0 %v439
        %518 = vmatprep.subr.mxu0 %v456
        %519 = vmatpush1.msra.mxu0 %v455
        %520 = vmatprep.subr.mxu0 %v467
        %521 = vmatpush1.msra.mxu0 %v466
        %522 = vmatprep.subr.mxu0 %v409
        %523 = vmatpush1.msra.mxu0 %v407
        %524 = vmatprep.subr.mxu0 %v478
        %525 = vmatpush1.msra.mxu0 %v477
        %526 = vmatprep.subr.mxu0 %v489
        %527 = vmatpush1.msra.mxu0 %v488
        %528 = vmatprep.subr.mxu0 %v498
        %529 = vmatpush1.msra.mxu0 %v495
        %530 = vmatprep.subr.mxu0 %v509
        %531 = vmatpush1.msra.mxu0 %v508
        %532 = vmatprep.subr.mxu0 0.0
        %533 = vmatpush1.msra.mxu0 0.0
        %534 = vmatprep.subr.mxu0 0.0
        %535 = vmatpush1.msra.mxu0 0.0
        %536 = vmatprep.subr.mxu0 0.0
        %537 = vmatpush1.msra.mxu0 0.0
        %538 = vmatprep.subr.mxu0 0.0
        %539 = vmatpush1.msra.mxu0 0.0
        %540 = vmatprep.subr.mxu0 0.0
        %541 = vmatpush1.msra.mxu0 0.0
        %542 = vmatprep.subr.mxu0 0.0
        %543 = vmatpush1.msra.mxu0 0.0
        %544 = vmatprep.subr.mxu0 0.0
        %545 = vmatpush1.msra.mxu0 0.0
        %546 = vmatprep.subr.mxu0 0.0
        %547 = vmatpush1.msra.mxu0 0.0
        %548 = vmatprep.subr.mxu0 0.0
        %549 = vmatpush1.msra.mxu0 0.0
        %550 = vmatprep.subr.mxu0 0.0
        %551 = vmatpush1.msra.mxu0 0.0
        %552 = vmatprep.subr.mxu0 0.0
        %553 = vmatpush1.msra.mxu0 0.0
        %554 = vmatprep.subr.mxu0 0.0
        %555 = vmatpush1.msra.mxu0 0.0
        %556 = vmatprep.subr.mxu0 0.0
        %557 = vmatpush1.msra.mxu0 0.0
        %558 = vmatprep.subr.mxu0 0.0
        %559 = vmatpush1.msra.mxu0 0.0
        %560 = vmatprep.subr.mxu0 0.0
        %561 = vmatpush1.msra.mxu0 0.0
        %562 = vmatprep.subr.mxu0 0.0
        %563 = vmatpush1.msra.mxu0 0.0
        %564 = vmatprep.subr.mxu0 0.0
        %565 = vmatpush1.msra.mxu0 0.0
        %566 = vmatprep.subr.mxu0 0.0
        %567 = vmatpush1.msra.mxu0 0.0
        %568 = vmatprep.subr.mxu0 0.0
        %569 = vmatpush1.msra.mxu0 0.0
        %570 = vmatprep.subr.mxu0 0.0
        %571 = vmatpush1.msra.mxu0 0.0
        %572 = vmatprep.subr.mxu0 0.0
        %573 = vmatpush1.msra.mxu0 0.0
        %574 = vmatprep.subr.mxu0 0.0
        %575 = vmatpush1.msra.mxu0 0.0
        %576 = vmatprep.subr.mxu0 0.0
        %577 = vmatpush1.msra.mxu0 0.0
        %578 = vmatprep.mubr.f32.mxu0 0.0
        %579 = vmatmul.mubr.f32.gmra.mrb[0].mxu0 %v512
        %v580 = vpop.f32.mrb[0].mxu0
        %v581 = vadd.f32 0.0, %v580
        %v582 = vpop.f32.mrb[0].mxu0
        %v583 = vadd.f32 0.0, %v582
        %584 = vdwg.mxu0
        %v585 = vld [vmem:[%s256] sm:$0xff]
        %v586 = vld [vmem:[%s256 + $0x8] sm:$0xff]
        %588 = vrot.lane.b32.xlu0 %v585, 86
        %v589 = vpop.permute.xlu0 %588
        %591 = vrot.lane.b32.xlu0 %v585, 82
        %v592 = vpop.permute.xlu0 %591
        %594 = vrot.lane.b32.xlu0 %v585, 78
        %v595 = vpop.permute.xlu0 %594
        %597 = vrot.lane.b32.xlu0 %v585, 74
        %v598 = vpop.permute.xlu0 %597
        %v600 = vcombine.high %v585, %v585
        %601 = vrot.lane.b32.xlu0 %v585, 70
        %v602 = vpop.permute.xlu0 %601
        %603 = vrot.lane.b32.xlu0 %v600, 70
        %v604 = vpop.permute.xlu0 %603
        %vm605 = vcmask 572416
        %v606 = vsel %vm605, %v602, %v604
        %608 = vrot.lane.b32.xlu0 %v600, 66
        %v609 = vpop.permute.xlu0 %608
        %611 = vrot.lane.b32.xlu0 %v600, 62
        %v612 = vpop.permute.xlu0 %611
        %614 = vrot.lane.b32.xlu0 %v600, 58
        %v615 = vpop.permute.xlu0 %614
        %617 = vrot.lane.b32.xlu0 %v600, 54
        %v618 = vpop.permute.xlu0 %617
        %620 = vrot.lane.b32.xlu0 %v600, 50
        %v621 = vpop.permute.xlu0 %620
        %624 = vrot.lane.b32.xlu0 %v600, 46
        %v625 = vpop.permute.xlu0 %624
        %626 = vrot.lane.b32.xlu0 %v586, 46
        %v627 = vpop.permute.xlu0 %626
        %vm628 = vcmask 375808
        %v629 = vsel %vm628, %v625, %v627
        %631 = vrot.lane.b32.xlu0 %v586, 42
        %v632 = vpop.permute.xlu0 %631
        %634 = vrot.lane.b32.xlu0 %v586, 38
        %v635 = vpop.permute.xlu0 %634
        %637 = vrot.lane.b32.xlu0 %v586, 34
        %v638 = vpop.permute.xlu0 %637
        %640 = vrot.lane.b32.xlu0 %v586, 30
        %v641 = vpop.permute.xlu0 %640
        %643 = vrot.lane.b32.xlu0 %v586, 26
        %v644 = vpop.permute.xlu0 %643
        %v646 = vsel %vm435, %v589, %v592
        %vm647 = vcmask 261120
        %v648 = vsel %vm647, %v646, %v595
        %vm649 = vcmask 392192
        %v650 = vsel %vm649, %v648, %v598
        %v651 = vsel %vm336, %v650, %v606
        %vm652 = vcmask 654336
        %v653 = vsel %vm652, %v651, %v609
        %vm654 = vcmask 785408
        %v655 = vsel %vm654, %v653, %v612
        %v656 = vsel %vm494, %v655, %v615
        %v657 = vsel %vm435, %v618, %v621
        %v658 = vsel %vm647, %v657, %v629
        %v659 = vsel %vm649, %v658, %v632
        %v660 = vsel %vm336, %v659, %v635
        %v661 = vsel %vm652, %v660, %v638
        %v662 = vsel %vm654, %v661, %v641
        %v663 = vsel %vm494, %v662, %v644
        %v666 = vrot.slane %v656, 4
        %v667 = vrot.slane %v663, 4
        %vm670 = vcmask 1043456
        %v671 = vsel %vm670, %v581, %v666
        %v672 = vsel %vm670, %v583, %v667
        %v673 = vld [vmem:[%s4] sm:$0xf]
        %676 = vrot.lane.b32.xlu0 %v671, 17
        %v677 = vpop.permute.xlu0 %676
        %678 = vrot.lane.b32.xlu0 %v672, 17
        %v679 = vpop.permute.xlu0 %678
        %v680 = vsel %vm418, %v677, %v679
        %v683 = vsel %vm418, 0.0, %v677
        %v684 = vsel %vm427, %v683, 0.0
        %v685 = vsel %vm428, %v680, 0.0
        %686 = vrot.lane.b32.xlu0 %v671, 16
        %v687 = vpop.permute.xlu0 %686
        %688 = vrot.lane.b32.xlu0 %v672, 16
        %v689 = vpop.permute.xlu0 %688
        %v690 = vsel %vm435, %v687, %v689
        %v693 = vsel %vm435, 0.0, %v687
        %694 = vrot.lane.b32.xlu0 %v671, 15
        %v695 = vpop.permute.xlu0 %694
        %696 = vrot.lane.b32.xlu0 %v672, 15
        %v697 = vpop.permute.xlu0 %696
        %v698 = vsel %vm444, %v695, %v697
        %v701 = vsel %vm444, 0.0, %v695
        %v702 = vsel %vm453, %v701, 0.0
        %v703 = vsel %vm454, %v698, 0.0
        %704 = vrot.lane.b32.xlu0 %v671, 1
        %v705 = vpop.permute.xlu0 %704
        %706 = vrot.lane.b32.xlu0 %v672, 1
        %v707 = vpop.permute.xlu0 %706
        %v708 = vsel %vm461, %v705, %v707
        %v711 = vsel %vm461, 0.0, %v705
        %v712 = vsel %vm427, %v711, 0.0
        %v713 = vsel %vm428, %v708, 0.0
        %714 = vrot.lane.b32.xlu0 %v671, 127
        %v715 = vpop.permute.xlu0 %714
        %716 = vrot.lane.b32.xlu0 %v672, 127
        %v717 = vpop.permute.xlu0 %716
        %v718 = vsel %vm472, %v715, %v717
        %v721 = vsel %vm472, %v717, 0.0
        %v722 = vsel %vm453, %v718, 0.0
        %v723 = vsel %vm454, %v721, 0.0
        %724 = vrot.lane.b32.xlu0 %v671, 113
        %v725 = vpop.permute.xlu0 %724
        %726 = vrot.lane.b32.xlu0 %v672, 113
        %v727 = vpop.permute.xlu0 %726
        %v728 = vsel %vm483, %v725, %v727
        %v731 = vsel %vm483, %v727, 0.0
        %v732 = vsel %vm427, %v728, 0.0
        %v733 = vsel %vm428, %v731, 0.0
        %734 = vrot.lane.b32.xlu0 %v671, 112
        %v735 = vpop.permute.xlu0 %734
        %736 = vrot.lane.b32.xlu0 %v672, 112
        %v737 = vpop.permute.xlu0 %736
        %v738 = vsel %vm494, %v735, %v737
        %v741 = vsel %vm494, %v737, 0.0
        %742 = vrot.lane.b32.xlu0 %v671, 111
        %v743 = vpop.permute.xlu0 %742
        %744 = vrot.lane.b32.xlu0 %v672, 111
        %v745 = vpop.permute.xlu0 %744
        %v746 = vsel %vm503, %v743, %v745
        %v749 = vsel %vm503, %v745, 0.0
        %v750 = vsel %vm453, %v746, 0.0
        %v751 = vsel %vm454, %v749, 0.0
        %v753 = vsel %vm510, %v673, 0
        %755 = vmatprep.subr.mxu0 %v685
        %756 = vmatpush1.msra.mxu0 %v684
        %757 = vmatprep.subr.mxu0 %v690
        %758 = vmatpush1.msra.mxu0 %v693
        %759 = vmatprep.subr.mxu0 %v703
        %760 = vmatpush1.msra.mxu0 %v702
        %761 = vmatprep.subr.mxu0 %v713
        %762 = vmatpush1.msra.mxu0 %v712
        %763 = vmatprep.subr.mxu0 %v672
        %764 = vmatpush1.msra.mxu0 %v671
        %765 = vmatprep.subr.mxu0 %v723
        %766 = vmatpush1.msra.mxu0 %v722
        %767 = vmatprep.subr.mxu0 %v733
        %768 = vmatpush1.msra.mxu0 %v732
        %769 = vmatprep.subr.mxu0 %v741
        %770 = vmatpush1.msra.mxu0 %v738
        %771 = vmatprep.subr.mxu0 %v751
        %772 = vmatpush1.msra.mxu0 %v750
        %773 = vmatprep.subr.mxu0 0.0
        %774 = vmatpush1.msra.mxu0 0.0
        %775 = vmatprep.subr.mxu0 0.0
        %776 = vmatpush1.msra.mxu0 0.0
        %777 = vmatprep.subr.mxu0 0.0
        %778 = vmatpush1.msra.mxu0 0.0
        %779 = vmatprep.subr.mxu0 0.0
        %780 = vmatpush1.msra.mxu0 0.0
        %781 = vmatprep.subr.mxu0 0.0
        %782 = vmatpush1.msra.mxu0 0.0
        %783 = vmatprep.subr.mxu0 0.0
        %784 = vmatpush1.msra.mxu0 0.0
        %785 = vmatprep.subr.mxu0 0.0
        %786 = vmatpush1.msra.mxu0 0.0
        %787 = vmatprep.subr.mxu0 0.0
        %788 = vmatpush1.msra.mxu0 0.0
        %789 = vmatprep.subr.mxu0 0.0
        %790 = vmatpush1.msra.mxu0 0.0
        %791 = vmatprep.subr.mxu0 0.0
        %792 = vmatpush1.msra.mxu0 0.0
        %793 = vmatprep.subr.mxu0 0.0
        %794 = vmatpush1.msra.mxu0 0.0
        %795 = vmatprep.subr.mxu0 0.0
        %796 = vmatpush1.msra.mxu0 0.0
        %797 = vmatprep.subr.mxu0 0.0
        %798 = vmatpush1.msra.mxu0 0.0
        %799 = vmatprep.subr.mxu0 0.0
        %800 = vmatpush1.msra.mxu0 0.0
        %801 = vmatprep.subr.mxu0 0.0
        %802 = vmatpush1.msra.mxu0 0.0
        %803 = vmatprep.subr.mxu0 0.0
        %804 = vmatpush1.msra.mxu0 0.0
        %805 = vmatprep.subr.mxu0 0.0
        %806 = vmatpush1.msra.mxu0 0.0
        %807 = vmatprep.subr.mxu0 0.0
        %808 = vmatpush1.msra.mxu0 0.0
        %809 = vmatprep.subr.mxu0 0.0
        %810 = vmatpush1.msra.mxu0 0.0
        %811 = vmatprep.subr.mxu0 0.0
        %812 = vmatpush1.msra.mxu0 0.0
        %813 = vmatprep.subr.mxu0 0.0
        %814 = vmatpush1.msra.mxu0 0.0
        %815 = vmatprep.subr.mxu0 0.0
        %816 = vmatpush1.msra.mxu0 0.0
        %817 = vmatprep.subr.mxu0 0.0
        %818 = vmatpush1.msra.mxu0 0.0
        %819 = vmatprep.mubr.f32.mxu0 0.0
        %820 = vmatmul.mubr.f32.gmra.mrb[0].mxu0 %v753
        %v821 = vpop.f32.mrb[0].mxu0
        %v822 = vadd.f32 0.0, %v821
        %v823 = vpop.f32.mrb[0].mxu0
        %v824 = vadd.f32 0.0, %v823
        %825 = vdwg.mxu0
        %v826 = vmax.f32 %v822, 0.0
        %v827 = vmax.f32 %v824, 0.0
        %v830 = vcombine.low %v826, %v827
        %832 = vst [vmem:[%s291] sm:$0xff] %v830
        %s833 = sand.u32 %s148, 1
        %s834 = scalar_lea.sflag [#allocation4], %s833
        %s835 = sand.u32 %s148, 1
        %s836 = smul.addr %s835, 8
        %s837 = scalar_lea.vmem [#allocation8], %s836
        // Predicated region
        $region53: #{tpu_custom_call.1} parent=39 // pred_check
          %p838 = pneg %p158
        $region54: #{tpu_custom_call.1} parent=39 // pred_check_branch
          %840 = sbr.rel (%p838) target = $region56
        $region55: #{tpu_custom_call.1} parent=39 // pred_region
          %s842 = ssub.s32 128, 128
          %843 = vsyncadd %s834, %s842
          %s844 = smul.addr %s25, 2
          %s845 = smul.addr %s844, 64
          %s846 = scalar_lea.hbm %s5, %s845
          %s848 = sshll.u32 %s837, 4
          %s849 = int_to_ptr.vmem [resolvable:$true] %s848
          %851 = dma.vmem_to_hbm [thread:$0]  %s849, 128, %s846, %s834
        $region56: #{tpu_custom_call.1} parent=39 // pred_fallthru
          _
      $region40: #{tpu_custom_call.1} parent=5 // pred_fallthru
        _
      %p852 = scmp.le.s32.totalorder 2, %s20
      // Predicated region
      $region57: #{tpu_custom_call.1} parent=5 // pred_check
        %p853 = pneg %p852
      $region58: #{tpu_custom_call.1} parent=5 // pred_check_branch
        %855 = sbr.rel (%p853) target = $region60
      $region59: #{tpu_custom_call.1} parent=5 // pred_region
        %s856 = ssub.s32 %s20, 2
        // Predicated region
        $region61: #{tpu_custom_call.1} parent=59 // pred_check
          %p857 = pneg %p164
        $region62: #{tpu_custom_call.1} parent=59 // pred_check_branch
          %859 = sbr.rel (%p857) target = $region64
        $region63: #{tpu_custom_call.1} parent=59 // pred_region
          %s860 = sand.u32 %s149, 1
          %s861 = scalar_lea.sflag [#allocation4], %s860
          %s862 = sand.u32 %s149, 1
          %s863 = smul.addr %s862, 8
          %s864 = scalar_lea.vmem [#allocation8], %s863
          %865 = dma.done %s861, 128
        $region64: #{tpu_custom_call.1} parent=59 // pred_fallthru
          _
      $region60: #{tpu_custom_call.1} parent=5 // pred_fallthru
        _
    $region6: #{tpu_custom_call.1} parent=1 // loop_footer
      %s24 = sadd.s32 1, %s20
    $region7: #{tpu_custom_call.1} parent=1 // loop_footer_branch
      %19 = sbr.rel target = $region3
    $region8: #{tpu_custom_call.1} parent=1 // loop_exit
      _
    %866 = vsyncpa [#allocation3], 1
    %s867 = scalar_lea.sflag [#allocation3], 1
    %868 = vsyncpa %s867, 1
    %869 = vsyncpa [#allocation6], 1
    %s870 = scalar_lea.sflag [#allocation6], 1
    %871 = vsyncpa %s870, 1
    %872 = vsyncpa [#allocation4], 1
    %s873 = scalar_lea.sflag [#allocation4], 1
    %874 = vsyncpa %s873, 1

</llo_original>
